<compile_context>
chip_gen: v5e
topology: v5e:2x2
jax: 0.10.0
libtpu: 0.0.40
codegen_flags: <defaults>
</compile_context>

<pallas_src>
import functools

import jax
import jax.numpy as jnp
from jax import lax
from jax.experimental import pallas as pl
from jax.experimental.pallas import tpu as pltpu

_EPS = 1e-12   # torch.nn.functional.normalize default eps


# --------------------------------------------------------------------------- #
# Fused forward kernel.
# --------------------------------------------------------------------------- #
def _moco_kernel(xq_ref, xk_ref, wq_ref, wk_ref, ptr_ref, queue_hbm_ref,
                 logits_ref, wk_new_ref, queue_out_ref,
                 queue_vmem, keys_vmem, load_sem, store_sem, *, inv_t, m):
    b = xq_ref.shape[0]

    # Start streaming the queue into VMEM; overlaps with the encoder work below.
    load = pltpu.make_async_copy(queue_hbm_ref, queue_vmem, load_sem)
    load.start()

    # _momentum_update_key_encoder: param_k = m * param_k + (1 - m) * param_q.
    wk_new = wk_ref[...] * m + wq_ref[...] * (1.0 - m)
    wk_new_ref[...] = wk_new

    # Encoder (linear stub for CreateResNet1D), f32 MXU accumulate.
    # (Kept as two tiny matmuls; a block-diag fusion saves nothing at this size.)
    q = jnp.dot(xq_ref[...], wq_ref[...], preferred_element_type=jnp.float32)
    k = jnp.dot(xk_ref[...], wk_new, preferred_element_type=jnp.float32)

    # F.normalize(dim=1): x / max(||x||, eps) == x * min(rsqrt(sum x^2), 1/eps).
    # rsqrt goes to the EUP slot (free next to the VPU work).
    inv_q = jnp.minimum(lax.rsqrt(jnp.sum(q * q, axis=1, keepdims=True)),
                        jnp.float32(1.0 / _EPS))
    inv_k = jnp.minimum(lax.rsqrt(jnp.sum(k * k, axis=1, keepdims=True)),
                        jnp.float32(1.0 / _EPS))
    qn = q * inv_q
    kn = k * inv_k
    keys_vmem[...] = kn.astype(keys_vmem.dtype)   # DMA source for the enqueue

    # Fold 1/T into q once (B*dim elements) instead of scaling B*(B+K) logits.
    qs = qn * inv_t

    # l_pos and the compacted off-diagonal in-batch negatives (already /T).
    l_pos = jnp.sum(qs * kn, axis=1, keepdims=True)                     # (B, 1)
    l_batch = lax.dot_general(qs, kn, (((1,), (1,)), ((), ())),
                              preferred_element_type=jnp.float32)       # (B, B)
    r2 = lax.broadcasted_iota(jnp.int32, (b, b - 1), 0)
    c2 = lax.broadcasted_iota(jnp.int32, (b, b - 1), 1)
    l_neg_batch = jnp.where(c2 < r2, l_batch[:, :b - 1], l_batch[:, 1:])
    logits_ref[:, 0:1] = l_pos
    logits_ref[:, 1:b] = l_neg_batch

    # Queue negatives: wait for the queue DMA, one MXU matmul, store at a
    # static column offset of the final logits block (no XLA concat needed).
    load.wait()
    queue_tile = queue_vmem[...]
    if queue_tile.dtype != jnp.float32:
        queue_tile = queue_tile.astype(jnp.float32)
    l_neg_queue = lax.dot_general(qs, queue_tile, (((1,), (1,)), ((), ())),
                                  preferred_element_type=jnp.float32)   # (B, K)
    logits_ref[:, b:] = l_neg_queue

    # _dequeue_and_enqueue: queue rows [ptr, ptr+B) <- normalized keys, in place
    # (queue_out_ref aliases queue_hbm_ref; the queue was fully read above, so
    # the ordering is safe without any extra barrier).
    ptr = pl.multiple_of(ptr_ref[0], b)
    store = pltpu.make_async_copy(keys_vmem,
                                  queue_out_ref.at[pl.ds(ptr, b), :],
                                  store_sem)
    store.start()
    store.wait()


def _vmem_limit_bytes(b, feat, dim, k_sz, queue_itemsize):
    need = (k_sz * dim * queue_itemsize                     # queue staging
            + b * (b + k_sz) * 4                            # logits block
            + (2 * b * feat + 3 * feat * dim + 2 * b * dim) * 4)
    if 2 * need <= 16 * 1024 * 1024:     # comfortably inside the v5e default
        return None
    return min(2 * need, 60 * 1024 * 1024)   # stay under v7x's 64 MiB physical


def _moco_fused(xq, xk, wq, wk, queue_ptr, queue, *, inv_t, m):
    b, feat = xq.shape
    dim = wq.shape[1]
    k_sz = queue.shape[0]
    vmem = pl.BlockSpec(memory_space=pltpu.MemorySpace.VMEM)
    smem = pl.BlockSpec(memory_space=pltpu.MemorySpace.SMEM)
    hbm = pl.BlockSpec(memory_space=pl.ANY)
    return pl.pallas_call(
        functools.partial(_moco_kernel, inv_t=inv_t, m=m),
        out_shape=(
            jax.ShapeDtypeStruct((b, b + k_sz), jnp.float32),   # logits
            jax.ShapeDtypeStruct((feat, dim), jnp.float32),     # updated wk
            jax.ShapeDtypeStruct((k_sz, dim), queue.dtype),     # queue (in place)
        ),
        in_specs=[vmem, vmem, vmem, vmem, smem, hbm],
        out_specs=(vmem, vmem, hbm),
        scratch_shapes=[
            pltpu.VMEM((k_sz, dim), queue.dtype),   # queue staging buffer
            pltpu.VMEM((b, dim), queue.dtype),      # normalized keys (DMA src)
            pltpu.SemaphoreType.DMA,                # queue load
            pltpu.SemaphoreType.DMA,                # enqueue store
        ],
        input_output_aliases={5: 2},                # queue updated in place
        compiler_params=pltpu.CompilerParams(
            vmem_limit_bytes=_vmem_limit_bytes(
                b, feat, dim, k_sz, jnp.dtype(queue.dtype).itemsize)),
    )(xq, xk, wq, wk, queue_ptr, queue)


# --------------------------------------------------------------------------- #
# Full MoCo.forward semantics (single-device path).
# --------------------------------------------------------------------------- #
def moco_forward(im_q, im_k, wq, wk, queue, queue_ptr, *, m=0.999, T=0.07):
    b = im_q.shape[0]
    k_sz = queue.shape[0]
    assert b >= 2, "in-batch negatives need batch >= 2"
    assert k_sz % b == 0, "Queue size must be divisible by batch size"

    feat = im_q.shape[1] * im_q.shape[2]
    xq = im_q.reshape(b, feat).astype(jnp.float32)
    xk = im_k.reshape(b, feat).astype(jnp.float32)

    logits, wk_new, new_queue = _moco_fused(
        xq, xk, wq, wk, queue_ptr.astype(jnp.int32), queue,
        inv_t=1.0 / T, m=m)

    labels = jnp.zeros((b,), dtype=jnp.int32)   # TODO(synk): torch uses int64
    new_ptr = (queue_ptr + b) % k_sz
    return logits, labels, wk_new, new_queue, new_ptr


# --------------------------------------------------------------------------- #
# Plain-JAX f32 reference (queue stored (K, dim); highest matmul precision).
# --------------------------------------------------------------------------- #
def _reference_forward(im_q, im_k, wq, wk, queue, T):
    hp = lax.Precision.HIGHEST
    b = im_q.shape[0]
    xq = im_q.reshape(b, -1)
    xk = im_k.reshape(b, -1)
    q = jnp.dot(xq, wq, precision=hp)
    k = jnp.dot(xk, wk, precision=hp)
    qn = q / jnp.maximum(jnp.linalg.norm(q, axis=1, keepdims=True), _EPS)
    kn = k / jnp.maximum(jnp.linalg.norm(k, axis=1, keepdims=True), _EPS)
    l_pos = jnp.sum(qn * kn, axis=1, keepdims=True)
    l_batch = jnp.dot(qn, kn.T, precision=hp)
    mask = ~jnp.eye(b, dtype=bool)
    l_neg_batch = l_batch[mask].reshape(b, b - 1)
    l_neg_queue = jnp.dot(qn, queue.astype(jnp.float32).T, precision=hp)
    logits = jnp.concatenate([l_pos, l_neg_batch, l_neg_queue], axis=1) / T
    return logits, qn, kn


if __name__ == "__main__":
    B, C, L = 2, 4, 16       # im_q / im_k: (batch, channels, length) 1-D signals
    DIM = 32                 # MoCo feature dim (module default dim=32)
    K_QUEUE = 1024           # queue size (multiple of the batch size)
    M_MOMENTUM = 0.999
    TEMP = 0.07

    key = jax.random.PRNGKey(0)
    k_imq, k_imk, k_wq, k_queue = jax.random.split(key, 4)

    im_q = jax.random.normal(k_imq, (B, C, L), dtype=jnp.float32)
    im_k = jax.random.normal(k_imk, (B, C, L), dtype=jnp.float32)

    # Encoder stub weights; encoder_k is initialized as a copy of encoder_q.
    wq = jax.random.normal(k_wq, (C * L, DIM), dtype=jnp.float32) * 0.05
    wk = wq

    # Queue buffer: unit-norm random keys, stored (K, dim) f32 (PyTorch keeps an
    # f32 (dim, K) buffer; the transposed storage makes the enqueue a contiguous
    # row-block DMA).
    queue0 = jax.random.normal(k_queue, (K_QUEUE, DIM), dtype=jnp.float32)
    queue0 = queue0 / jnp.maximum(
        jnp.linalg.norm(queue0, axis=1, keepdims=True), _EPS)
    ptr0 = jnp.zeros((1,), dtype=jnp.int32)

    # Separate copy for the reference checks (queue0 itself is donated below).
    queue_backup = jnp.copy(queue0)

    step = jax.jit(
        functools.partial(moco_forward, m=M_MOMENTUM, T=TEMP),
        donate_argnums=(4,))   # donate the queue so the enqueue is truly in place

    logits, labels, wk_new, new_queue, new_ptr = step(
        im_q, im_k, wq, wk, queue0, ptr0)
    jax.block_until_ready((logits, labels, wk_new, new_queue, new_ptr))

    # ---- checks against the plain-JAX reference --------------------------------
    wk_upd = wk * M_MOMENTUM + wq * (1.0 - M_MOMENTUM)
    ref_logits, _, ref_k = _reference_forward(
        im_q, im_k, wq, wk_upd, queue_backup, TEMP)

    n_logits = 1 + (B - 1) + K_QUEUE
    assert logits.shape == (B, n_logits), logits.shape
    assert labels.shape == (B,) and labels.dtype == jnp.int32
    # all-f32 path (encoder, normalize, both logit matmuls) -> tight tolerance
    assert jnp.allclose(logits, ref_logits, atol=2e-3, rtol=2e-3), \
        "logits mismatch"
    # dequeue/enqueue: first B rows replaced by normalized keys, rest untouched
    assert jnp.allclose(new_queue[:B], ref_k, atol=1e-3), \
        "enqueued keys mismatch"
    assert jnp.array_equal(new_queue[B:], queue_backup[B:]), \
        "untouched queue rows changed"
    assert int(new_ptr[0]) == B % K_QUEUE
    assert jnp.allclose(wk_new, wk_upd, atol=1e-6, rtol=1e-6)

    print("KERNEL_OK")
</pallas_src>

<mosaic_0001>
module attributes {stable_mosaic.version = 11 : i64} {
  func.func @_moco_kernel(%arg0: memref<2x64xf32, #tpu.memory_space<vmem>>, %arg1: memref<2x64xf32, #tpu.memory_space<vmem>>, %arg2: memref<64x32xf32, #tpu.memory_space<vmem>>, %arg3: memref<64x32xf32, #tpu.memory_space<vmem>>, %arg4: memref<1xi32, #tpu.memory_space<smem>>, %arg5: memref<1024x32xf32, #tpu.memory_space<any>>, %arg6: memref<2x1026xf32, #tpu.memory_space<vmem>>, %arg7: memref<64x32xf32, #tpu.memory_space<vmem>>, %arg8: memref<1024x32xf32, #tpu.memory_space<any>>, %arg9: memref<1024x32xf32, #tpu.memory_space<vmem>>, %arg10: memref<2x32xf32, #tpu.memory_space<vmem>>, %arg11: memref<!tpu.dma_semaphore, #tpu.memory_space<semaphore_mem>>, %arg12: memref<!tpu.dma_semaphore, #tpu.memory_space<semaphore_mem>>) attributes {dimension_semantics = [], scalar_prefetch = 0 : i64, scratch_operands = 4 : i64, tpu.core_type = #tpu.core_type<tc>} {
    tpu.enqueue_dma source(%arg5 : memref<1024x32xf32, #tpu.memory_space<any>>) target(%arg9 : memref<1024x32xf32, #tpu.memory_space<vmem>>) target_semaphore(%arg11 : memref<!tpu.dma_semaphore, #tpu.memory_space<semaphore_mem>>)
    %c0 = arith.constant 0 : index
    %c0_0 = arith.constant 0 : index
    %0 = vector.load %arg3[%c0, %c0_0] : memref<64x32xf32, #tpu.memory_space<vmem>>, vector<64x32xf32>
    %cst = arith.constant 9.990000e-01 : f32
    %1 = vector.broadcast %cst : f32 to vector<64x32xf32>
    %2 = arith.mulf %0, %1 : vector<64x32xf32>
    %c0_1 = arith.constant 0 : index
    %c0_2 = arith.constant 0 : index
    %3 = vector.load %arg2[%c0_1, %c0_2] : memref<64x32xf32, #tpu.memory_space<vmem>>, vector<64x32xf32>
    %cst_3 = arith.constant 1.000000e-03 : f32
    %4 = vector.broadcast %cst_3 : f32 to vector<64x32xf32>
    %5 = arith.mulf %3, %4 : vector<64x32xf32>
    %6 = arith.addf %2, %5 : vector<64x32xf32>
    %c0_4 = arith.constant 0 : index
    %c0_5 = arith.constant 0 : index
    %7 = vector.load %arg7[%c0_4, %c0_5] : memref<64x32xf32, #tpu.memory_space<vmem>>, vector<64x32xf32>
    tpu.vector_store %arg7[%c0_4, %c0_5], %6 {strides = array<i32>} : memref<64x32xf32, #tpu.memory_space<vmem>>, vector<64x32xf32>,
    %c0_6 = arith.constant 0 : index
    %c0_7 = arith.constant 0 : index
    %8 = vector.load %arg0[%c0_6, %c0_7] : memref<2x64xf32, #tpu.memory_space<vmem>>, vector<2x64xf32>
    %c0_8 = arith.constant 0 : index
    %c0_9 = arith.constant 0 : index
    %9 = vector.load %arg2[%c0_8, %c0_9] : memref<64x32xf32, #tpu.memory_space<vmem>>, vector<64x32xf32>
    %cst_10 = arith.constant dense<0.000000e+00> : vector<2x32xf32>
    %10 = tpu.matmul %8, %9, %cst_10 {dimension_numbers = #tpu.dot_dimension_numbers<[1], [0], [0], [1], [0, 0, 1, 1], [], []>} : vector<2x64xf32>, vector<64x32xf32>, vector<2x32xf32> -> vector<2x32xf32>
    %c0_11 = arith.constant 0 : index
    %c0_12 = arith.constant 0 : index
    %11 = vector.load %arg1[%c0_11, %c0_12] : memref<2x64xf32, #tpu.memory_space<vmem>>, vector<2x64xf32>
    %cst_13 = arith.constant dense<0.000000e+00> : vector<2x32xf32>
    %12 = tpu.matmul %11, %6, %cst_13 {dimension_numbers = #tpu.dot_dimension_numbers<[1], [0], [0], [1], [0, 0, 1, 1], [], []>} : vector<2x64xf32>, vector<64x32xf32>, vector<2x32xf32> -> vector<2x32xf32>
    %13 = arith.mulf %10, %10 : vector<2x32xf32>
    %cst_14 = arith.constant dense<0.000000e+00> : vector<2xf32>
    %14 = vector.multi_reduction <add>, %13, %cst_14 [1] : vector<2x32xf32> to vector<2xf32>
    %15 = vector.shape_cast %14 : vector<2xf32> to vector<2x1xf32>
    %16 = math.rsqrt %15 : vector<2x1xf32>
    %cst_15 = arith.constant 9.99999995E+11 : f32
    %17 = vector.broadcast %cst_15 : f32 to vector<2x1xf32>
    %18 = arith.minimumf %16, %17 : vector<2x1xf32>
    %19 = arith.mulf %12, %12 : vector<2x32xf32>
    %cst_16 = arith.constant dense<0.000000e+00> : vector<2xf32>
    %20 = vector.multi_reduction <add>, %19, %cst_16 [1] : vector<2x32xf32> to vector<2xf32>
    %21 = vector.shape_cast %20 : vector<2xf32> to vector<2x1xf32>
    %22 = math.rsqrt %21 : vector<2x1xf32>
    %cst_17 = arith.constant 9.99999995E+11 : f32
    %23 = vector.broadcast %cst_17 : f32 to vector<2x1xf32>
    %24 = arith.minimumf %22, %23 : vector<2x1xf32>
    %25 = vector.broadcast %18 : vector<2x1xf32> to vector<2x32xf32>
    %26 = arith.mulf %10, %25 : vector<2x32xf32>
    %27 = vector.broadcast %24 : vector<2x1xf32> to vector<2x32xf32>
    %28 = arith.mulf %12, %27 : vector<2x32xf32>
    %c0_18 = arith.constant 0 : index
    %c0_19 = arith.constant 0 : index
    %29 = vector.load %arg10[%c0_18, %c0_19] : memref<2x32xf32, #tpu.memory_space<vmem>>, vector<2x32xf32>
    tpu.vector_store %arg10[%c0_18, %c0_19], %28 {strides = array<i32>} : memref<2x32xf32, #tpu.memory_space<vmem>>, vector<2x32xf32>,
    %cst_20 = arith.constant 14.2857141 : f32
    %30 = vector.broadcast %cst_20 : f32 to vector<2x32xf32>
    %31 = arith.mulf %26, %30 : vector<2x32xf32>
    %32 = arith.mulf %31, %28 : vector<2x32xf32>
    %cst_21 = arith.constant dense<0.000000e+00> : vector<2xf32>
    %33 = vector.multi_reduction <add>, %32, %cst_21 [1] : vector<2x32xf32> to vector<2xf32>
    %34 = vector.shape_cast %33 : vector<2xf32> to vector<2x1xf32>
    %cst_22 = arith.constant dense<0.000000e+00> : vector<2x2xf32>
    %35 = tpu.matmul %31, %28, %cst_22 {dimension_numbers = #tpu.dot_dimension_numbers<[1], [1], [0], [0], [0, 0, 1, 0], [], []>} : vector<2x32xf32>, vector<2x32xf32>, vector<2x2xf32> -> vector<2x2xf32>
    %36 = tpu.iota {dimensions = array<i32: 0>} : vector<2x1xi32>
    %37 = tpu.iota {dimensions = array<i32: 1>} : vector<2x1xi32>
    %38 = arith.cmpi slt, %37, %36 : vector<2x1xi32>
    %39 = vector.extract_strided_slice %35 {offsets = [0, 0], sizes = [2, 1], strides = [1, 1]} : vector<2x2xf32> to vector<2x1xf32>
    %40 = vector.extract_strided_slice %35 {offsets = [0, 1], sizes = [2, 1], strides = [1, 1]} : vector<2x2xf32> to vector<2x1xf32>
    %41 = arith.select %38, %39, %40 : vector<2x1xi1>, vector<2x1xf32>
    %c0_23 = arith.constant 0 : index
    %c0_24 = arith.constant 0 : index
    %42 = vector.load %arg6[%c0_23, %c0_24] : memref<2x1026xf32, #tpu.memory_space<vmem>>, vector<2x1xf32>
    tpu.vector_store %arg6[%c0_23, %c0_24], %34 {strides = array<i32>} : memref<2x1026xf32, #tpu.memory_space<vmem>>, vector<2x1xf32>,
    %c0_25 = arith.constant 0 : index
    %c1 = arith.constant 1 : index
    %43 = vector.load %arg6[%c0_25, %c1] : memref<2x1026xf32, #tpu.memory_space<vmem>>, vector<2x1xf32>
    tpu.vector_store %arg6[%c0_25, %c1], %41 {strides = array<i32>} : memref<2x1026xf32, #tpu.memory_space<vmem>>, vector<2x1xf32>,
    tpu.wait_dma2 semaphore(%arg11 : memref<!tpu.dma_semaphore, #tpu.memory_space<semaphore_mem>>) src(%arg5 : memref<1024x32xf32, #tpu.memory_space<any>>) dst(%arg9 : memref<1024x32xf32, #tpu.memory_space<vmem>>)
    %c0_26 = arith.constant 0 : index
    %c0_27 = arith.constant 0 : index
    %44 = vector.load %arg9[%c0_26, %c0_27] : memref<1024x32xf32, #tpu.memory_space<vmem>>, vector<1024x32xf32>
    %cst_28 = arith.constant dense<0.000000e+00> : vector<2x1024xf32>
    %45 = tpu.matmul %31, %44, %cst_28 {dimension_numbers = #tpu.dot_dimension_numbers<[1], [1], [0], [0], [0, 0, 1, 0], [], []>} : vector<2x32xf32>, vector<1024x32xf32>, vector<2x1024xf32> -> vector<2x1024xf32>
    %c0_29 = arith.constant 0 : index
    %c2 = arith.constant 2 : index
    %46 = vector.load %arg6[%c0_29, %c2] : memref<2x1026xf32, #tpu.memory_space<vmem>>, vector<2x1024xf32>
    tpu.vector_store %arg6[%c0_29, %c2], %45 {strides = array<i32>} : memref<2x1026xf32, #tpu.memory_space<vmem>>, vector<2x1024xf32>,
    %c0_30 = arith.constant 0 : index
    %47 = memref.load %arg4[%c0_30] : memref<1xi32, #tpu.memory_space<smem>>
    %48 = tpu.assume_multiple %47, 2 : i32
    %c0_i32 = arith.constant 0 : i32
    %49 = tpu.memref_slice %arg8[%48, %c0_i32] : memref<1024x32xf32, #tpu.memory_space<any>> -> memref<2x32xf32, #tpu.memory_space<any>>
    tpu.enqueue_dma source(%arg10 : memref<2x32xf32, #tpu.memory_space<vmem>>) target(%49 : memref<2x32xf32, #tpu.memory_space<any>>) target_semaphore(%arg12 : memref<!tpu.dma_semaphore, #tpu.memory_space<semaphore_mem>>)
    %c0_i32_31 = arith.constant 0 : i32
    %50 = tpu.memref_slice %arg8[%48, %c0_i32_31] : memref<1024x32xf32, #tpu.memory_space<any>> -> memref<2x32xf32, #tpu.memory_space<any>>
    tpu.wait_dma2 semaphore(%arg12 : memref<!tpu.dma_semaphore, #tpu.memory_space<semaphore_mem>>) src(%arg10 : memref<2x32xf32, #tpu.memory_space<vmem>>) dst(%50 : memref<2x32xf32, #tpu.memory_space<any>>)
    return
  }
}

</mosaic_0001>

<llo_original>
// kernel: moco_forward.1
$region0: #{moco_forward.1}
  #allocation0 [shape = 'u32[]', space=smem, size = 0x4, offset = 0x4, fixed_abs, tag = 'smem constant byte address 0x4 - core index']
  #allocation1 [shape = 'u32[72,128]{1,0:T(1,128)}', space=vmem, size = 0x9000, scoped, tag = 'internal scratch']
  #allocation2 [shape = 'f32[1024,32]{1,0:T(8,128)}', space=vmem, size = 0x80000, scoped, tag = 'scratch operand']
  #allocation3 [shape = 'f32[2,32]{1,0:T(2,128)}', space=vmem, size = 0x400, scoped, tag = 'scratch operand']
  #allocation4 [shape = 's32[1]{0}', space=sflag, size = 0x4, scoped, tag = 'scratch operand']
  #allocation5 [shape = 's32[1]{0}', space=sflag, size = 0x4, scoped, tag = 'scratch operand']
  #allocation6 [shape = 's32[1]{0:T(128)S(6)}', space=smem, size = 0x200, scoped, tag = 'scoped memory for moco_forward.1']
  #allocation9 [shape = 's32[]', space=sflag, size = 0x4, offset = 0, fixed_abs, tag = 'sflag constant byte address 0x0 - dummy sync flag']
  #allocation10 [shape = 's32[]', space=sflag, size = 0x4, offset = 0, fixed_abs, tag = 'sflag constant byte address 0x0 - dummy sync flag']
  %s0 = inlined_call_operand.vmem [shape: f32[2,64], index: 0, kind: input, shape index: {}]
  %s1 = inlined_call_operand.vmem [shape: f32[2,64], index: 1, kind: input, shape index: {}]
  %s2 = inlined_call_operand.vmem [shape: f32[64,32], index: 2, kind: input, shape index: {}]
  %s3 = inlined_call_operand.vmem [shape: f32[64,32], index: 3, kind: input, shape index: {}]
  %s4 = inlined_call_operand.<no memory space> [shape: s32[1], index: 4, kind: input, shape index: {}]
  %s5 = inlined_call_operand.vmem [shape: f32[1024,32], index: 5, kind: input, shape index: {}, may-alias: {5,8}]
  %s6 = inlined_call_operand.hbm [shape: f32[2,1026], index: 6, kind: output, shape index: {0}]
  %s7 = inlined_call_operand.vmem [shape: f32[64,32], index: 7, kind: output, shape index: {1}]
  %s8 = inlined_call_operand.vmem [shape: f32[1024,32], index: 8, kind: output, shape index: {2}, may-alias: {5,8}]
  %9 = xla_tuple %s6, %s7, %s8
  %s10 = sld [smem:[#allocation0]]
  $region87: #{moco_forward.1} parent=0
    _
  %s12 = ssub.s32 1, %s10
  %s13 = scalar_select 0, %s12, %s10
  %14 = sst [smem:[#allocation6]] %s4
  $region1: #{moco_forward.1} parent=0
    #allocation7 [shape = 'u8[9216]{0}', space=vmem, size = 0x2400, scoped, tag = 'output window, operand 0, single buffered']
    #allocation8 [shape = 's32[1]{0}', space=sflag, size = 0x4, scoped, tag = 'scoped memory for moco_forward.1']
    %15 = vsyncpa [#allocation8], 0
    // Predicated region
    $region2: #{moco_forward.1} parent=1 // pred_check
      _
    $region3: #{moco_forward.1} parent=1 // pred_check_branch
      %17 = sbr.rel (0) target = $region5
    $region4: #{moco_forward.1} parent=1 // pred_region
      _
    $region5: #{moco_forward.1} parent=1 // pred_fallthru
      _
    // Predicated region
    $region6: #{moco_forward.1} parent=1 // pred_check
      _
    $region7: #{moco_forward.1} parent=1 // pred_check_branch
      %19 = sbr.rel (0) target = $region9
    $region8: #{moco_forward.1} parent=1 // pred_region
      _
    $region9: #{moco_forward.1} parent=1 // pred_fallthru
      _
    // Predicated region
    $region10: #{moco_forward.1} parent=1 // pred_check
      _
    $region11: #{moco_forward.1} parent=1 // pred_check_branch
      %21 = sbr.rel (0) target = $region13
    $region12: #{moco_forward.1} parent=1 // pred_region
      _
    $region13: #{moco_forward.1} parent=1 // pred_fallthru
      _
    // Predicated region
    $region14: #{moco_forward.1} parent=1 // pred_check
      _
    $region15: #{moco_forward.1} parent=1 // pred_check_branch
      %23 = sbr.rel (0) target = $region17
    $region16: #{moco_forward.1} parent=1 // pred_region
      _
    $region17: #{moco_forward.1} parent=1 // pred_fallthru
      _
    // Predicated region
    $region18: #{moco_forward.1} parent=1 // pred_check
      _
    $region19: #{moco_forward.1} parent=1 // pred_check_branch
      %25 = sbr.rel (0) target = $region21
    $region20: #{moco_forward.1} parent=1 // pred_region
      _
    $region21: #{moco_forward.1} parent=1 // pred_fallthru
      _
    // Predicated region
    $region22: #{moco_forward.1} parent=1 // pred_check
      _
    $region23: #{moco_forward.1} parent=1 // pred_check_branch
      %27 = sbr.rel (0) target = $region25
    $region24: #{moco_forward.1} parent=1 // pred_region
      loop: start=0, step=1, limit=1
      $region26: #{moco_forward.1} parent=24 // loop_pre_header
        _
      $region27: #{moco_forward.1} parent=24 // loop_header
        %s29 = sphi 0, %s33
        %p30 = scmp.ge.s32.totalorder %s29, 1
        %s34 = sphi %s5, %s5
        %s35 = sphi [#allocation2], [#allocation2]
      $region28: #{moco_forward.1} parent=24 // loop_header_branch
        %32 = sbr.rel (%p30) target = $region32
      $region29: #{moco_forward.1} parent=24 // loop_body
        %v36 = vld [vmem:[%s34] sm:$0xff]
        %37 = vst [vmem:[%s35] sm:$0xff] %v36
        %v38 = vld [vmem:[%s34 + $0x8] sm:$0xff]
        %39 = vst [vmem:[%s35 + $0x8] sm:$0xff] %v38
        %v40 = vld [vmem:[%s34 + $0x10] sm:$0xff]
        %41 = vst [vmem:[%s35 + $0x10] sm:$0xff] %v40
        %v42 = vld [vmem:[%s34 + $0x18] sm:$0xff]
        %43 = vst [vmem:[%s35 + $0x18] sm:$0xff] %v42
        %v44 = vld [vmem:[%s34 + $0x20] sm:$0xff]
        %45 = vst [vmem:[%s35 + $0x20] sm:$0xff] %v44
        %v46 = vld [vmem:[%s34 + $0x28] sm:$0xff]
        %47 = vst [vmem:[%s35 + $0x28] sm:$0xff] %v46
        %v48 = vld [vmem:[%s34 + $0x30] sm:$0xff]
        %49 = vst [vmem:[%s35 + $0x30] sm:$0xff] %v48
        %v50 = vld [vmem:[%s34 + $0x38] sm:$0xff]
        %51 = vst [vmem:[%s35 + $0x38] sm:$0xff] %v50
        %v52 = vld [vmem:[%s34 + $0x40] sm:$0xff]
        %53 = vst [vmem:[%s35 + $0x40] sm:$0xff] %v52
        %v54 = vld [vmem:[%s34 + $0x48] sm:$0xff]
        %55 = vst [vmem:[%s35 + $0x48] sm:$0xff] %v54
        %v56 = vld [vmem:[%s34 + $0x50] sm:$0xff]
        %57 = vst [vmem:[%s35 + $0x50] sm:$0xff] %v56
        %v58 = vld [vmem:[%s34 + $0x58] sm:$0xff]
        %59 = vst [vmem:[%s35 + $0x58] sm:$0xff] %v58
        %v60 = vld [vmem:[%s34 + $0x60] sm:$0xff]
        %61 = vst [vmem:[%s35 + $0x60] sm:$0xff] %v60
        %v62 = vld [vmem:[%s34 + $0x68] sm:$0xff]
        %63 = vst [vmem:[%s35 + $0x68] sm:$0xff] %v62
        %v64 = vld [vmem:[%s34 + $0x70] sm:$0xff]
        %65 = vst [vmem:[%s35 + $0x70] sm:$0xff] %v64
        %v66 = vld [vmem:[%s34 + $0x78] sm:$0xff]
        %67 = vst [vmem:[%s35 + $0x78] sm:$0xff] %v66
        %v68 = vld [vmem:[%s34 + $0x80] sm:$0xff]
        %69 = vst [vmem:[%s35 + $0x80] sm:$0xff] %v68
        %v70 = vld [vmem:[%s34 + $0x88] sm:$0xff]
        %71 = vst [vmem:[%s35 + $0x88] sm:$0xff] %v70
        %v72 = vld [vmem:[%s34 + $0x90] sm:$0xff]
        %73 = vst [vmem:[%s35 + $0x90] sm:$0xff] %v72
        %v74 = vld [vmem:[%s34 + $0x98] sm:$0xff]
        %75 = vst [vmem:[%s35 + $0x98] sm:$0xff] %v74
        %v76 = vld [vmem:[%s34 + $0xa0] sm:$0xff]
        %77 = vst [vmem:[%s35 + $0xa0] sm:$0xff] %v76
        %v78 = vld [vmem:[%s34 + $0xa8] sm:$0xff]
        %79 = vst [vmem:[%s35 + $0xa8] sm:$0xff] %v78
        %v80 = vld [vmem:[%s34 + $0xb0] sm:$0xff]
        %81 = vst [vmem:[%s35 + $0xb0] sm:$0xff] %v80
        %v82 = vld [vmem:[%s34 + $0xb8] sm:$0xff]
        %83 = vst [vmem:[%s35 + $0xb8] sm:$0xff] %v82
        %v84 = vld [vmem:[%s34 + $0xc0] sm:$0xff]
        %85 = vst [vmem:[%s35 + $0xc0] sm:$0xff] %v84
        %v86 = vld [vmem:[%s34 + $0xc8] sm:$0xff]
        %87 = vst [vmem:[%s35 + $0xc8] sm:$0xff] %v86
        %v88 = vld [vmem:[%s34 + $0xd0] sm:$0xff]
        %89 = vst [vmem:[%s35 + $0xd0] sm:$0xff] %v88
        %v90 = vld [vmem:[%s34 + $0xd8] sm:$0xff]
        %91 = vst [vmem:[%s35 + $0xd8] sm:$0xff] %v90
        %v92 = vld [vmem:[%s34 + $0xe0] sm:$0xff]
        %93 = vst [vmem:[%s35 + $0xe0] sm:$0xff] %v92
        %v94 = vld [vmem:[%s34 + $0xe8] sm:$0xff]
        %95 = vst [vmem:[%s35 + $0xe8] sm:$0xff] %v94
        %v96 = vld [vmem:[%s34 + $0xf0] sm:$0xff]
        %97 = vst [vmem:[%s35 + $0xf0] sm:$0xff] %v96
        %v98 = vld [vmem:[%s34 + $0xf8] sm:$0xff]
        %99 = vst [vmem:[%s35 + $0xf8] sm:$0xff] %v98
        %v100 = vld [vmem:[%s34 + $0x100] sm:$0xff]
        %101 = vst [vmem:[%s35 + $0x100] sm:$0xff] %v100
        %v102 = vld [vmem:[%s34 + $0x108] sm:$0xff]
        %103 = vst [vmem:[%s35 + $0x108] sm:$0xff] %v102
        %v104 = vld [vmem:[%s34 + $0x110] sm:$0xff]
        %105 = vst [vmem:[%s35 + $0x110] sm:$0xff] %v104
        %v106 = vld [vmem:[%s34 + $0x118] sm:$0xff]
        %107 = vst [vmem:[%s35 + $0x118] sm:$0xff] %v106
        %v108 = vld [vmem:[%s34 + $0x120] sm:$0xff]
        %109 = vst [vmem:[%s35 + $0x120] sm:$0xff] %v108
        %v110 = vld [vmem:[%s34 + $0x128] sm:$0xff]
        %111 = vst [vmem:[%s35 + $0x128] sm:$0xff] %v110
        %v112 = vld [vmem:[%s34 + $0x130] sm:$0xff]
        %113 = vst [vmem:[%s35 + $0x130] sm:$0xff] %v112
        %v114 = vld [vmem:[%s34 + $0x138] sm:$0xff]
        %115 = vst [vmem:[%s35 + $0x138] sm:$0xff] %v114
        %v116 = vld [vmem:[%s34 + $0x140] sm:$0xff]
        %117 = vst [vmem:[%s35 + $0x140] sm:$0xff] %v116
        %v118 = vld [vmem:[%s34 + $0x148] sm:$0xff]
        %119 = vst [vmem:[%s35 + $0x148] sm:$0xff] %v118
        %v120 = vld [vmem:[%s34 + $0x150] sm:$0xff]
        %121 = vst [vmem:[%s35 + $0x150] sm:$0xff] %v120
        %v122 = vld [vmem:[%s34 + $0x158] sm:$0xff]
        %123 = vst [vmem:[%s35 + $0x158] sm:$0xff] %v122
        %v124 = vld [vmem:[%s34 + $0x160] sm:$0xff]
        %125 = vst [vmem:[%s35 + $0x160] sm:$0xff] %v124
        %v126 = vld [vmem:[%s34 + $0x168] sm:$0xff]
        %127 = vst [vmem:[%s35 + $0x168] sm:$0xff] %v126
        %v128 = vld [vmem:[%s34 + $0x170] sm:$0xff]
        %129 = vst [vmem:[%s35 + $0x170] sm:$0xff] %v128
        %v130 = vld [vmem:[%s34 + $0x178] sm:$0xff]
        %131 = vst [vmem:[%s35 + $0x178] sm:$0xff] %v130
        %v132 = vld [vmem:[%s34 + $0x180] sm:$0xff]
        %133 = vst [vmem:[%s35 + $0x180] sm:$0xff] %v132
        %v134 = vld [vmem:[%s34 + $0x188] sm:$0xff]
        %135 = vst [vmem:[%s35 + $0x188] sm:$0xff] %v134
        %v136 = vld [vmem:[%s34 + $0x190] sm:$0xff]
        %137 = vst [vmem:[%s35 + $0x190] sm:$0xff] %v136
        %v138 = vld [vmem:[%s34 + $0x198] sm:$0xff]
        %139 = vst [vmem:[%s35 + $0x198] sm:$0xff] %v138
        %v140 = vld [vmem:[%s34 + $0x1a0] sm:$0xff]
        %141 = vst [vmem:[%s35 + $0x1a0] sm:$0xff] %v140
        %v142 = vld [vmem:[%s34 + $0x1a8] sm:$0xff]
        %143 = vst [vmem:[%s35 + $0x1a8] sm:$0xff] %v142
        %v144 = vld [vmem:[%s34 + $0x1b0] sm:$0xff]
        %145 = vst [vmem:[%s35 + $0x1b0] sm:$0xff] %v144
        %v146 = vld [vmem:[%s34 + $0x1b8] sm:$0xff]
        %147 = vst [vmem:[%s35 + $0x1b8] sm:$0xff] %v146
        %v148 = vld [vmem:[%s34 + $0x1c0] sm:$0xff]
        %149 = vst [vmem:[%s35 + $0x1c0] sm:$0xff] %v148
        %v150 = vld [vmem:[%s34 + $0x1c8] sm:$0xff]
        %151 = vst [vmem:[%s35 + $0x1c8] sm:$0xff] %v150
        %v152 = vld [vmem:[%s34 + $0x1d0] sm:$0xff]
        %153 = vst [vmem:[%s35 + $0x1d0] sm:$0xff] %v152
        %v154 = vld [vmem:[%s34 + $0x1d8] sm:$0xff]
        %155 = vst [vmem:[%s35 + $0x1d8] sm:$0xff] %v154
        %v156 = vld [vmem:[%s34 + $0x1e0] sm:$0xff]
        %157 = vst [vmem:[%s35 + $0x1e0] sm:$0xff] %v156
        %v158 = vld [vmem:[%s34 + $0x1e8] sm:$0xff]
        %159 = vst [vmem:[%s35 + $0x1e8] sm:$0xff] %v158
        %v160 = vld [vmem:[%s34 + $0x1f0] sm:$0xff]
        %161 = vst [vmem:[%s35 + $0x1f0] sm:$0xff] %v160
        %v162 = vld [vmem:[%s34 + $0x1f8] sm:$0xff]
        %163 = vst [vmem:[%s35 + $0x1f8] sm:$0xff] %v162
        %v164 = vld [vmem:[%s34 + $0x200] sm:$0xff]
        %165 = vst [vmem:[%s35 + $0x200] sm:$0xff] %v164
        %v166 = vld [vmem:[%s34 + $0x208] sm:$0xff]
        %167 = vst [vmem:[%s35 + $0x208] sm:$0xff] %v166
        %v168 = vld [vmem:[%s34 + $0x210] sm:$0xff]
        %169 = vst [vmem:[%s35 + $0x210] sm:$0xff] %v168
        %v170 = vld [vmem:[%s34 + $0x218] sm:$0xff]
        %171 = vst [vmem:[%s35 + $0x218] sm:$0xff] %v170
        %v172 = vld [vmem:[%s34 + $0x220] sm:$0xff]
        %173 = vst [vmem:[%s35 + $0x220] sm:$0xff] %v172
        %v174 = vld [vmem:[%s34 + $0x228] sm:$0xff]
        %175 = vst [vmem:[%s35 + $0x228] sm:$0xff] %v174
        %v176 = vld [vmem:[%s34 + $0x230] sm:$0xff]
        %177 = vst [vmem:[%s35 + $0x230] sm:$0xff] %v176
        %v178 = vld [vmem:[%s34 + $0x238] sm:$0xff]
        %179 = vst [vmem:[%s35 + $0x238] sm:$0xff] %v178
        %v180 = vld [vmem:[%s34 + $0x240] sm:$0xff]
        %181 = vst [vmem:[%s35 + $0x240] sm:$0xff] %v180
        %v182 = vld [vmem:[%s34 + $0x248] sm:$0xff]
        %183 = vst [vmem:[%s35 + $0x248] sm:$0xff] %v182
        %v184 = vld [vmem:[%s34 + $0x250] sm:$0xff]
        %185 = vst [vmem:[%s35 + $0x250] sm:$0xff] %v184
        %v186 = vld [vmem:[%s34 + $0x258] sm:$0xff]
        %187 = vst [vmem:[%s35 + $0x258] sm:$0xff] %v186
        %v188 = vld [vmem:[%s34 + $0x260] sm:$0xff]
        %189 = vst [vmem:[%s35 + $0x260] sm:$0xff] %v188
        %v190 = vld [vmem:[%s34 + $0x268] sm:$0xff]
        %191 = vst [vmem:[%s35 + $0x268] sm:$0xff] %v190
        %v192 = vld [vmem:[%s34 + $0x270] sm:$0xff]
        %193 = vst [vmem:[%s35 + $0x270] sm:$0xff] %v192
        %v194 = vld [vmem:[%s34 + $0x278] sm:$0xff]
        %195 = vst [vmem:[%s35 + $0x278] sm:$0xff] %v194
        %v196 = vld [vmem:[%s34 + $0x280] sm:$0xff]
        %197 = vst [vmem:[%s35 + $0x280] sm:$0xff] %v196
        %v198 = vld [vmem:[%s34 + $0x288] sm:$0xff]
        %199 = vst [vmem:[%s35 + $0x288] sm:$0xff] %v198
        %v200 = vld [vmem:[%s34 + $0x290] sm:$0xff]
        %201 = vst [vmem:[%s35 + $0x290] sm:$0xff] %v200
        %v202 = vld [vmem:[%s34 + $0x298] sm:$0xff]
        %203 = vst [vmem:[%s35 + $0x298] sm:$0xff] %v202
        %v204 = vld [vmem:[%s34 + $0x2a0] sm:$0xff]
        %205 = vst [vmem:[%s35 + $0x2a0] sm:$0xff] %v204
        %v206 = vld [vmem:[%s34 + $0x2a8] sm:$0xff]
        %207 = vst [vmem:[%s35 + $0x2a8] sm:$0xff] %v206
        %v208 = vld [vmem:[%s34 + $0x2b0] sm:$0xff]
        %209 = vst [vmem:[%s35 + $0x2b0] sm:$0xff] %v208
        %v210 = vld [vmem:[%s34 + $0x2b8] sm:$0xff]
        %211 = vst [vmem:[%s35 + $0x2b8] sm:$0xff] %v210
        %v212 = vld [vmem:[%s34 + $0x2c0] sm:$0xff]
        %213 = vst [vmem:[%s35 + $0x2c0] sm:$0xff] %v212
        %v214 = vld [vmem:[%s34 + $0x2c8] sm:$0xff]
        %215 = vst [vmem:[%s35 + $0x2c8] sm:$0xff] %v214
        %v216 = vld [vmem:[%s34 + $0x2d0] sm:$0xff]
        %217 = vst [vmem:[%s35 + $0x2d0] sm:$0xff] %v216
        %v218 = vld [vmem:[%s34 + $0x2d8] sm:$0xff]
        %219 = vst [vmem:[%s35 + $0x2d8] sm:$0xff] %v218
        %v220 = vld [vmem:[%s34 + $0x2e0] sm:$0xff]
        %221 = vst [vmem:[%s35 + $0x2e0] sm:$0xff] %v220
        %v222 = vld [vmem:[%s34 + $0x2e8] sm:$0xff]
        %223 = vst [vmem:[%s35 + $0x2e8] sm:$0xff] %v222
        %v224 = vld [vmem:[%s34 + $0x2f0] sm:$0xff]
        %225 = vst [vmem:[%s35 + $0x2f0] sm:$0xff] %v224
        %v226 = vld [vmem:[%s34 + $0x2f8] sm:$0xff]
        %227 = vst [vmem:[%s35 + $0x2f8] sm:$0xff] %v226
        %v228 = vld [vmem:[%s34 + $0x300] sm:$0xff]
        %229 = vst [vmem:[%s35 + $0x300] sm:$0xff] %v228
        %v230 = vld [vmem:[%s34 + $0x308] sm:$0xff]
        %231 = vst [vmem:[%s35 + $0x308] sm:$0xff] %v230
        %v232 = vld [vmem:[%s34 + $0x310] sm:$0xff]
        %233 = vst [vmem:[%s35 + $0x310] sm:$0xff] %v232
        %v234 = vld [vmem:[%s34 + $0x318] sm:$0xff]
        %235 = vst [vmem:[%s35 + $0x318] sm:$0xff] %v234
        %v236 = vld [vmem:[%s34 + $0x320] sm:$0xff]
        %237 = vst [vmem:[%s35 + $0x320] sm:$0xff] %v236
        %v238 = vld [vmem:[%s34 + $0x328] sm:$0xff]
        %239 = vst [vmem:[%s35 + $0x328] sm:$0xff] %v238
        %v240 = vld [vmem:[%s34 + $0x330] sm:$0xff]
        %241 = vst [vmem:[%s35 + $0x330] sm:$0xff] %v240
        %v242 = vld [vmem:[%s34 + $0x338] sm:$0xff]
        %243 = vst [vmem:[%s35 + $0x338] sm:$0xff] %v242
        %v244 = vld [vmem:[%s34 + $0x340] sm:$0xff]
        %245 = vst [vmem:[%s35 + $0x340] sm:$0xff] %v244
        %v246 = vld [vmem:[%s34 + $0x348] sm:$0xff]
        %247 = vst [vmem:[%s35 + $0x348] sm:$0xff] %v246
        %v248 = vld [vmem:[%s34 + $0x350] sm:$0xff]
        %249 = vst [vmem:[%s35 + $0x350] sm:$0xff] %v248
        %v250 = vld [vmem:[%s34 + $0x358] sm:$0xff]
        %251 = vst [vmem:[%s35 + $0x358] sm:$0xff] %v250
        %v252 = vld [vmem:[%s34 + $0x360] sm:$0xff]
        %253 = vst [vmem:[%s35 + $0x360] sm:$0xff] %v252
        %v254 = vld [vmem:[%s34 + $0x368] sm:$0xff]
        %255 = vst [vmem:[%s35 + $0x368] sm:$0xff] %v254
        %v256 = vld [vmem:[%s34 + $0x370] sm:$0xff]
        %257 = vst [vmem:[%s35 + $0x370] sm:$0xff] %v256
        %v258 = vld [vmem:[%s34 + $0x378] sm:$0xff]
        %259 = vst [vmem:[%s35 + $0x378] sm:$0xff] %v258
        %v260 = vld [vmem:[%s34 + $0x380] sm:$0xff]
        %261 = vst [vmem:[%s35 + $0x380] sm:$0xff] %v260
        %v262 = vld [vmem:[%s34 + $0x388] sm:$0xff]
        %263 = vst [vmem:[%s35 + $0x388] sm:$0xff] %v262
        %v264 = vld [vmem:[%s34 + $0x390] sm:$0xff]
        %265 = vst [vmem:[%s35 + $0x390] sm:$0xff] %v264
        %v266 = vld [vmem:[%s34 + $0x398] sm:$0xff]
        %267 = vst [vmem:[%s35 + $0x398] sm:$0xff] %v266
        %v268 = vld [vmem:[%s34 + $0x3a0] sm:$0xff]
        %269 = vst [vmem:[%s35 + $0x3a0] sm:$0xff] %v268
        %v270 = vld [vmem:[%s34 + $0x3a8] sm:$0xff]
        %271 = vst [vmem:[%s35 + $0x3a8] sm:$0xff] %v270
        %v272 = vld [vmem:[%s34 + $0x3b0] sm:$0xff]
        %273 = vst [vmem:[%s35 + $0x3b0] sm:$0xff] %v272
        %v274 = vld [vmem:[%s34 + $0x3b8] sm:$0xff]
        %275 = vst [vmem:[%s35 + $0x3b8] sm:$0xff] %v274
        %v276 = vld [vmem:[%s34 + $0x3c0] sm:$0xff]
        %277 = vst [vmem:[%s35 + $0x3c0] sm:$0xff] %v276
        %v278 = vld [vmem:[%s34 + $0x3c8] sm:$0xff]
        %279 = vst [vmem:[%s35 + $0x3c8] sm:$0xff] %v278
        %v280 = vld [vmem:[%s34 + $0x3d0] sm:$0xff]
        %281 = vst [vmem:[%s35 + $0x3d0] sm:$0xff] %v280
        %v282 = vld [vmem:[%s34 + $0x3d8] sm:$0xff]
        %283 = vst [vmem:[%s35 + $0x3d8] sm:$0xff] %v282
        %v284 = vld [vmem:[%s34 + $0x3e0] sm:$0xff]
        %285 = vst [vmem:[%s35 + $0x3e0] sm:$0xff] %v284
        %v286 = vld [vmem:[%s34 + $0x3e8] sm:$0xff]
        %287 = vst [vmem:[%s35 + $0x3e8] sm:$0xff] %v286
        %v288 = vld [vmem:[%s34 + $0x3f0] sm:$0xff]
        %289 = vst [vmem:[%s35 + $0x3f0] sm:$0xff] %v288
        %v290 = vld [vmem:[%s34 + $0x3f8] sm:$0xff]
        %291 = vst [vmem:[%s35 + $0x3f8] sm:$0xff] %v290
      $region30: #{moco_forward.1} parent=24 // loop_footer
        %s33 = sadd.s32 1, %s29
      $region31: #{moco_forward.1} parent=24 // loop_footer_branch
        %28 = sbr.rel target = $region27
      $region32: #{moco_forward.1} parent=24 // loop_exit
        _
    $region25: #{moco_forward.1} parent=1 // pred_fallthru
      _
    // Predicated region
    $region33: #{moco_forward.1} parent=1 // pred_check
      _
    $region34: #{moco_forward.1} parent=1 // pred_check_branch
      %293 = sbr.rel target = $region36
    $region35: #{moco_forward.1} parent=1 // pred_region
      _
    $region36: #{moco_forward.1} parent=1 // pred_fallthru
      _
    // Predicated region
    $region37: #{moco_forward.1} parent=1 // pred_check
      _
    $region38: #{moco_forward.1} parent=1 // pred_check_branch
      %296 = sbr.rel (0) target = $region40
    $region39: #{moco_forward.1} parent=1 // pred_region
      %297 = vsyncadd [#allocation4], 16384
    $region40: #{moco_forward.1} parent=1 // pred_fallthru
      _
    %v298 = vld [vmem:[%s3] sm:$0xff]
    %v299 = vld [vmem:[%s3 + $0x8] sm:$0xff]
    %v300 = vld [vmem:[%s3 + $0x10] sm:$0xff]
    %v301 = vld [vmem:[%s3 + $0x18] sm:$0xff]
    %v302 = vld [vmem:[%s3 + $0x20] sm:$0xff]
    %v303 = vld [vmem:[%s3 + $0x28] sm:$0xff]
    %v304 = vld [vmem:[%s3 + $0x30] sm:$0xff]
    %v305 = vld [vmem:[%s3 + $0x38] sm:$0xff]
    %v306 = vmul.f32 %v298, 0.999
    %v307 = vmul.f32 %v299, 0.999
    %v308 = vmul.f32 %v300, 0.999
    %v309 = vmul.f32 %v301, 0.999
    %v310 = vmul.f32 %v302, 0.999
    %v311 = vmul.f32 %v303, 0.999
    %v312 = vmul.f32 %v304, 0.999
    %v313 = vmul.f32 %v305, 0.999
    %v314 = vld [vmem:[%s2] sm:$0xff]
    %v315 = vld [vmem:[%s2 + $0x8] sm:$0xff]
    %v316 = vld [vmem:[%s2 + $0x10] sm:$0xff]
    %v317 = vld [vmem:[%s2 + $0x18] sm:$0xff]
    %v318 = vld [vmem:[%s2 + $0x20] sm:$0xff]
    %v319 = vld [vmem:[%s2 + $0x28] sm:$0xff]
    %v320 = vld [vmem:[%s2 + $0x30] sm:$0xff]
    %v321 = vld [vmem:[%s2 + $0x38] sm:$0xff]
    %v322 = vmul.f32 %v314, 0.001
    %v323 = vmul.f32 %v315, 0.001
    %v324 = vmul.f32 %v316, 0.001
    %v325 = vmul.f32 %v317, 0.001
    %v326 = vmul.f32 %v318, 0.001
    %v327 = vmul.f32 %v319, 0.001
    %v328 = vmul.f32 %v320, 0.001
    %v329 = vmul.f32 %v321, 0.001
    %v330 = vadd.f32 %v306, %v322
    %v331 = vadd.f32 %v307, %v323
    %v332 = vadd.f32 %v308, %v324
    %v333 = vadd.f32 %v309, %v325
    %v334 = vadd.f32 %v310, %v326
    %v335 = vadd.f32 %v311, %v327
    %v336 = vadd.f32 %v312, %v328
    %v337 = vadd.f32 %v313, %v329
    %vm338 = vcmask 261120
    %339 = vst.msk [vmem:[%s7] sm:$0xff] %vm338, %v330
    %340 = vst.msk [vmem:[%s7 + $0x8] sm:$0xff] %vm338, %v331
    %341 = vst.msk [vmem:[%s7 + $0x10] sm:$0xff] %vm338, %v332
    %342 = vst.msk [vmem:[%s7 + $0x18] sm:$0xff] %vm338, %v333
    %343 = vst.msk [vmem:[%s7 + $0x20] sm:$0xff] %vm338, %v334
    %344 = vst.msk [vmem:[%s7 + $0x28] sm:$0xff] %vm338, %v335
    %345 = vst.msk [vmem:[%s7 + $0x30] sm:$0xff] %vm338, %v336
    %346 = vst.msk [vmem:[%s7 + $0x38] sm:$0xff] %vm338, %v337
    %v347 = vld [vmem:[%s0] sm:$0x3]
    %v348 = vld [vmem:[%s2] sm:$0xff]
    %v349 = vld [vmem:[%s2 + $0x8] sm:$0xff]
    %v350 = vld [vmem:[%s2 + $0x10] sm:$0xff]
    %v351 = vld [vmem:[%s2 + $0x18] sm:$0xff]
    %v352 = vld [vmem:[%s2 + $0x20] sm:$0xff]
    %v353 = vld [vmem:[%s2 + $0x28] sm:$0xff]
    %v354 = vld [vmem:[%s2 + $0x30] sm:$0xff]
    %v355 = vld [vmem:[%s2 + $0x38] sm:$0xff]
    %vm356 = vcmask 523264
    %v358 = vsel %vm356, %v347, 0
    %360 = vmatpush.msra.mxu0 0.0
    %361 = vmatpush.msra.mxu0 0.0
    %362 = vmatpush.msra.mxu0 0.0
    %363 = vmatpush.msra.mxu0 0.0
    %364 = vmatpush.msra.mxu0 0.0
    %365 = vmatpush.msra.mxu0 0.0
    %366 = vmatpush.msra.mxu0 0.0
    %367 = vmatpush.msra.mxu0 0.0
    %368 = vmatpush.msra.mxu0 %v355
    %369 = vmatpush.msra.mxu0 %v354
    %370 = vmatpush.msra.mxu0 %v353
    %371 = vmatpush.msra.mxu0 %v352
    %372 = vmatpush.msra.mxu0 %v351
    %373 = vmatpush.msra.mxu0 %v350
    %374 = vmatpush.msra.mxu0 %v349
    %375 = vmatpush.msra.mxu0 %v348
    %376 = vmatmul.f32.gmra.mxu0 %v358
    %v377 = vpop.f32.mrf.mxu0
    %v378 = vadd.f32 0.0, %v377
    %379 = vdwg.mxu0
    %v380 = vld [vmem:[%s1] sm:$0x3]
    %v382 = vsel %vm356, %v380, 0
    %384 = vmatpush.msra.mxu0 0.0
    %385 = vmatpush.msra.mxu0 0.0
    %386 = vmatpush.msra.mxu0 0.0
    %387 = vmatpush.msra.mxu0 0.0
    %388 = vmatpush.msra.mxu0 0.0
    %389 = vmatpush.msra.mxu0 0.0
    %390 = vmatpush.msra.mxu0 0.0
    %391 = vmatpush.msra.mxu0 0.0
    %392 = vmatpush.msra.mxu0 %v337
    %393 = vmatpush.msra.mxu0 %v336
    %394 = vmatpush.msra.mxu0 %v335
    %395 = vmatpush.msra.mxu0 %v334
    %396 = vmatpush.msra.mxu0 %v333
    %397 = vmatpush.msra.mxu0 %v332
    %398 = vmatpush.msra.mxu0 %v331
    %399 = vmatpush.msra.mxu0 %v330
    %400 = vmatmul.f32.gmra.mxu0 %v382
    %v401 = vpop.f32.mrf.mxu0
    %v402 = vadd.f32 0.0, %v401
    %403 = vdwg.mxu0
    %v404 = vmul.f32 %v378, %v378
    %vm405 = vcmask 254976
    %v406 = vsel %vm405, %v404, 0.0
    %407 = vadd.xlane.f32.xlu0 %v406
    %v408 = vpop.xlane.xlu0 %407
    %v409 = vrsqrt.pop %v408
    %v410 = vmul.f32 %v409, %v408
    %v411 = vmul.f32 %v410, %v409
    %v412 = vmul.f32 0.5, %v411
    %v413 = vsub.f32 1.5, %v412
    %v414 = vmul.f32 %v409, %v413
    %vm415 = vweird.f32 %v408
    %vm416 = vweird.f32 %v409
    %vm417 = vmor %vm415, %vm416
    %v418 = vsel %vm417, %v409, %v414
    %v419 = vmin.f32 %v418, 1e+12
    %v420 = vmul.f32 %v402, %v402
    %v421 = vsel %vm405, %v420, 0.0
    %422 = vadd.xlane.f32.xlu0 %v421
    %v423 = vpop.xlane.xlu0 %422
    %v424 = vrsqrt.pop %v423
    %v425 = vmul.f32 %v424, %v423
    %v426 = vmul.f32 %v425, %v424
    %v427 = vmul.f32 0.5, %v426
    %v428 = vsub.f32 1.5, %v427
    %v429 = vmul.f32 %v424, %v428
    %vm430 = vweird.f32 %v423
    %vm431 = vweird.f32 %v424
    %vm432 = vmor %vm430, %vm431
    %v433 = vsel %vm432, %v424, %v429
    %v434 = vmin.f32 %v433, 1e+12
    %v435 = vmul.f32 %v378, %v419
    %v436 = vmul.f32 %v402, %v434
    %437 = vst.msk [vmem:[#allocation3] sm:$0x3] %vm405, %v436
    %v438 = vmul.f32 %v435, 14.285714
    %v439 = vmul.f32 %v438, %v436
    %v440 = vsel %vm405, %v439, 0.0
    %441 = vadd.xlane.f32.xlu0 %v440
    %v442 = vpop.xlane.xlu0 %441
    %v444 = vsel %vm338, %v438, 0
    %v447 = vsel %vm338, %v436, 0
    %449 = vmatpush.xpose.msra.mxu0 0.0
    %450 = vmatpush.xpose.msra.mxu0 0.0
    %451 = vmatpush.xpose.msra.mxu0 0.0
    %452 = vmatpush.xpose.msra.mxu0 0.0
    %453 = vmatpush.xpose.msra.mxu0 0.0
    %454 = vmatpush.xpose.msra.mxu0 0.0
    %455 = vmatpush.xpose.msra.mxu0 0.0
    %456 = vmatpush.xpose.msra.mxu0 0.0
    %457 = vmatpush.xpose.msra.mxu0 0.0
    %458 = vmatpush.xpose.msra.mxu0 0.0
    %459 = vmatpush.xpose.msra.mxu0 0.0
    %460 = vmatpush.xpose.msra.mxu0 0.0
    %461 = vmatpush.xpose.msra.mxu0 0.0
    %462 = vmatpush.xpose.msra.mxu0 0.0
    %463 = vmatpush.xpose.msra.mxu0 0.0
    %464 = vmatpush.xpose.msra.mxu0 %v447
    %465 = vmatmul.f32.gmra.mxu0 %v444
    %v466 = vpop.f32.mrf.mxu0
    %v467 = vadd.f32 0.0, %v466
    %468 = vdwg.mxu0
    %v469 = vlaneseq
    %v470 = vshrl.u32 %v469, 7
    %v471 = vlaneseq
    %v472 = vand.u32 %v471, 127
    %vm473 = vcmp.lt.s32.totalorder %v472, %v470
    %475 = vrot.lane.b32.xlu0 %v467, 127
    %v476 = vpop.permute.xlu0 %475
    %v478 = vsel %vm473, %v467, %v476
    %vm479 = vcmask 1024
    %480 = vst.msk [vmem:[#allocation7] sm:$0x3] %vm479, %v442
    %482 = vrot.lane.b32.xlu0 %v478, 1
    %v483 = vpop.permute.xlu0 %482
    %vm485 = vcmask 9224
    %486 = vst.msk [vmem:[#allocation7] sm:$0x3] %vm485, %v483
    %s487 = smul.u32 1024, 1
    %s488 = sshll.u32 %s487, 4
    %489 = dma.done [#allocation4], %s488
    %v490 = vld [vmem:[#allocation2] sm:$0xff]
    %v491 = vld [vmem:[#allocation2 + $0x8] sm:$0xff]
    %v492 = vld [vmem:[#allocation2 + $0x10] sm:$0xff]
    %v493 = vld [vmem:[#allocation2 + $0x18] sm:$0xff]
    %v494 = vld [vmem:[#allocation2 + $0x20] sm:$0xff]
    %v495 = vld [vmem:[#allocation2 + $0x28] sm:$0xff]
    %v496 = vld [vmem:[#allocation2 + $0x30] sm:$0xff]
    %v497 = vld [vmem:[#allocation2 + $0x38] sm:$0xff]
    %v498 = vld [vmem:[#allocation2 + $0x40] sm:$0xff]
    %v499 = vld [vmem:[#allocation2 + $0x48] sm:$0xff]
    %v500 = vld [vmem:[#allocation2 + $0x50] sm:$0xff]
    %v501 = vld [vmem:[#allocation2 + $0x58] sm:$0xff]
    %v502 = vld [vmem:[#allocation2 + $0x60] sm:$0xff]
    %v503 = vld [vmem:[#allocation2 + $0x68] sm:$0xff]
    %v504 = vld [vmem:[#allocation2 + $0x70] sm:$0xff]
    %v505 = vld [vmem:[#allocation2 + $0x78] sm:$0xff]
    %v506 = vld [vmem:[#allocation2 + $0x80] sm:$0xff]
    %v507 = vld [vmem:[#allocation2 + $0x88] sm:$0xff]
    %v508 = vld [vmem:[#allocation2 + $0x90] sm:$0xff]
    %v509 = vld [vmem:[#allocation2 + $0x98] sm:$0xff]
    %v510 = vld [vmem:[#allocation2 + $0xa0] sm:$0xff]
    %v511 = vld [vmem:[#allocation2 + $0xa8] sm:$0xff]
    %v512 = vld [vmem:[#allocation2 + $0xb0] sm:$0xff]
    %v513 = vld [vmem:[#allocation2 + $0xb8] sm:$0xff]
    %v514 = vld [vmem:[#allocation2 + $0xc0] sm:$0xff]
    %v515 = vld [vmem:[#allocation2 + $0xc8] sm:$0xff]
    %v516 = vld [vmem:[#allocation2 + $0xd0] sm:$0xff]
    %v517 = vld [vmem:[#allocation2 + $0xd8] sm:$0xff]
    %v518 = vld [vmem:[#allocation2 + $0xe0] sm:$0xff]
    %v519 = vld [vmem:[#allocation2 + $0xe8] sm:$0xff]
    %v520 = vld [vmem:[#allocation2 + $0xf0] sm:$0xff]
    %v521 = vld [vmem:[#allocation2 + $0xf8] sm:$0xff]
    %v522 = vld [vmem:[#allocation2 + $0x100] sm:$0xff]
    %v523 = vld [vmem:[#allocation2 + $0x108] sm:$0xff]
    %v524 = vld [vmem:[#allocation2 + $0x110] sm:$0xff]
    %v525 = vld [vmem:[#allocation2 + $0x118] sm:$0xff]
    %v526 = vld [vmem:[#allocation2 + $0x120] sm:$0xff]
    %v527 = vld [vmem:[#allocation2 + $0x128] sm:$0xff]
    %v528 = vld [vmem:[#allocation2 + $0x130] sm:$0xff]
    %v529 = vld [vmem:[#allocation2 + $0x138] sm:$0xff]
    %v530 = vld [vmem:[#allocation2 + $0x140] sm:$0xff]
    %v531 = vld [vmem:[#allocation2 + $0x148] sm:$0xff]
    %v532 = vld [vmem:[#allocation2 + $0x150] sm:$0xff]
    %v533 = vld [vmem:[#allocation2 + $0x158] sm:$0xff]
    %v534 = vld [vmem:[#allocation2 + $0x160] sm:$0xff]
    %v535 = vld [vmem:[#allocation2 + $0x168] sm:$0xff]
    %v536 = vld [vmem:[#allocation2 + $0x170] sm:$0xff]
    %v537 = vld [vmem:[#allocation2 + $0x178] sm:$0xff]
    %v538 = vld [vmem:[#allocation2 + $0x180] sm:$0xff]
    %v539 = vld [vmem:[#allocation2 + $0x188] sm:$0xff]
    %v540 = vld [vmem:[#allocation2 + $0x190] sm:$0xff]
    %v541 = vld [vmem:[#allocation2 + $0x198] sm:$0xff]
    %v542 = vld [vmem:[#allocation2 + $0x1a0] sm:$0xff]
    %v543 = vld [vmem:[#allocation2 + $0x1a8] sm:$0xff]
    %v544 = vld [vmem:[#allocation2 + $0x1b0] sm:$0xff]
    %v545 = vld [vmem:[#allocation2 + $0x1b8] sm:$0xff]
    %v546 = vld [vmem:[#allocation2 + $0x1c0] sm:$0xff]
    %v547 = vld [vmem:[#allocation2 + $0x1c8] sm:$0xff]
    %v548 = vld [vmem:[#allocation2 + $0x1d0] sm:$0xff]
    %v549 = vld [vmem:[#allocation2 + $0x1d8] sm:$0xff]
    %v550 = vld [vmem:[#allocation2 + $0x1e0] sm:$0xff]
    %v551 = vld [vmem:[#allocation2 + $0x1e8] sm:$0xff]
    %v552 = vld [vmem:[#allocation2 + $0x1f0] sm:$0xff]
    %v553 = vld [vmem:[#allocation2 + $0x1f8] sm:$0xff]
    %v554 = vld [vmem:[#allocation2 + $0x200] sm:$0xff]
    %v555 = vld [vmem:[#allocation2 + $0x208] sm:$0xff]
    %v556 = vld [vmem:[#allocation2 + $0x210] sm:$0xff]
    %v557 = vld [vmem:[#allocation2 + $0x218] sm:$0xff]
    %v558 = vld [vmem:[#allocation2 + $0x220] sm:$0xff]
    %v559 = vld [vmem:[#allocation2 + $0x228] sm:$0xff]
    %v560 = vld [vmem:[#allocation2 + $0x230] sm:$0xff]
    %v561 = vld [vmem:[#allocation2 + $0x238] sm:$0xff]
    %v562 = vld [vmem:[#allocation2 + $0x240] sm:$0xff]
    %v563 = vld [vmem:[#allocation2 + $0x248] sm:$0xff]
    %v564 = vld [vmem:[#allocation2 + $0x250] sm:$0xff]
    %v565 = vld [vmem:[#allocation2 + $0x258] sm:$0xff]
    %v566 = vld [vmem:[#allocation2 + $0x260] sm:$0xff]
    %v567 = vld [vmem:[#allocation2 + $0x268] sm:$0xff]
    %v568 = vld [vmem:[#allocation2 + $0x270] sm:$0xff]
    %v569 = vld [vmem:[#allocation2 + $0x278] sm:$0xff]
    %v570 = vld [vmem:[#allocation2 + $0x280] sm:$0xff]
    %v571 = vld [vmem:[#allocation2 + $0x288] sm:$0xff]
    %v572 = vld [vmem:[#allocation2 + $0x290] sm:$0xff]
    %v573 = vld [vmem:[#allocation2 + $0x298] sm:$0xff]
    %v574 = vld [vmem:[#allocation2 + $0x2a0] sm:$0xff]
    %v575 = vld [vmem:[#allocation2 + $0x2a8] sm:$0xff]
    %v576 = vld [vmem:[#allocation2 + $0x2b0] sm:$0xff]
    %v577 = vld [vmem:[#allocation2 + $0x2b8] sm:$0xff]
    %v578 = vld [vmem:[#allocation2 + $0x2c0] sm:$0xff]
    %v579 = vld [vmem:[#allocation2 + $0x2c8] sm:$0xff]
    %v580 = vld [vmem:[#allocation2 + $0x2d0] sm:$0xff]
    %v581 = vld [vmem:[#allocation2 + $0x2d8] sm:$0xff]
    %v582 = vld [vmem:[#allocation2 + $0x2e0] sm:$0xff]
    %v583 = vld [vmem:[#allocation2 + $0x2e8] sm:$0xff]
    %v584 = vld [vmem:[#allocation2 + $0x2f0] sm:$0xff]
    %v585 = vld [vmem:[#allocation2 + $0x2f8] sm:$0xff]
    %v586 = vld [vmem:[#allocation2 + $0x300] sm:$0xff]
    %v587 = vld [vmem:[#allocation2 + $0x308] sm:$0xff]
    %v588 = vld [vmem:[#allocation2 + $0x310] sm:$0xff]
    %v589 = vld [vmem:[#allocation2 + $0x318] sm:$0xff]
    %v590 = vld [vmem:[#allocation2 + $0x320] sm:$0xff]
    %v591 = vld [vmem:[#allocation2 + $0x328] sm:$0xff]
    %v592 = vld [vmem:[#allocation2 + $0x330] sm:$0xff]
    %v593 = vld [vmem:[#allocation2 + $0x338] sm:$0xff]
    %v594 = vld [vmem:[#allocation2 + $0x340] sm:$0xff]
    %v595 = vld [vmem:[#allocation2 + $0x348] sm:$0xff]
    %v596 = vld [vmem:[#allocation2 + $0x350] sm:$0xff]
    %v597 = vld [vmem:[#allocation2 + $0x358] sm:$0xff]
    %v598 = vld [vmem:[#allocation2 + $0x360] sm:$0xff]
    %v599 = vld [vmem:[#allocation2 + $0x368] sm:$0xff]
    %v600 = vld [vmem:[#allocation2 + $0x370] sm:$0xff]
    %v601 = vld [vmem:[#allocation2 + $0x378] sm:$0xff]
    %v602 = vld [vmem:[#allocation2 + $0x380] sm:$0xff]
    %v603 = vld [vmem:[#allocation2 + $0x388] sm:$0xff]
    %v604 = vld [vmem:[#allocation2 + $0x390] sm:$0xff]
    %v605 = vld [vmem:[#allocation2 + $0x398] sm:$0xff]
    %v606 = vld [vmem:[#allocation2 + $0x3a0] sm:$0xff]
    %v607 = vld [vmem:[#allocation2 + $0x3a8] sm:$0xff]
    %v608 = vld [vmem:[#allocation2 + $0x3b0] sm:$0xff]
    %v609 = vld [vmem:[#allocation2 + $0x3b8] sm:$0xff]
    %v610 = vld [vmem:[#allocation2 + $0x3c0] sm:$0xff]
    %v611 = vld [vmem:[#allocation2 + $0x3c8] sm:$0xff]
    %v612 = vld [vmem:[#allocation2 + $0x3d0] sm:$0xff]
    %v613 = vld [vmem:[#allocation2 + $0x3d8] sm:$0xff]
    %v614 = vld [vmem:[#allocation2 + $0x3e0] sm:$0xff]
    %v615 = vld [vmem:[#allocation2 + $0x3e8] sm:$0xff]
    %v616 = vld [vmem:[#allocation2 + $0x3f0] sm:$0xff]
    %v617 = vld [vmem:[#allocation2 + $0x3f8] sm:$0xff]
    %v619 = vsel %vm338, %v490, 0
    %v622 = vsel %vm338, %v491, 0
    %v625 = vsel %vm338, %v492, 0
    %v628 = vsel %vm338, %v493, 0
    %v631 = vsel %vm338, %v494, 0
    %v634 = vsel %vm338, %v495, 0
    %v637 = vsel %vm338, %v496, 0
    %v640 = vsel %vm338, %v497, 0
    %v643 = vsel %vm338, %v498, 0
    %v646 = vsel %vm338, %v499, 0
    %v649 = vsel %vm338, %v500, 0
    %v652 = vsel %vm338, %v501, 0
    %v655 = vsel %vm338, %v502, 0
    %v658 = vsel %vm338, %v503, 0
    %v661 = vsel %vm338, %v504, 0
    %v664 = vsel %vm338, %v505, 0
    %v667 = vsel %vm338, %v506, 0
    %v670 = vsel %vm338, %v507, 0
    %v673 = vsel %vm338, %v508, 0
    %v676 = vsel %vm338, %v509, 0
    %v679 = vsel %vm338, %v510, 0
    %v682 = vsel %vm338, %v511, 0
    %v685 = vsel %vm338, %v512, 0
    %v688 = vsel %vm338, %v513, 0
    %v691 = vsel %vm338, %v514, 0
    %v694 = vsel %vm338, %v515, 0
    %v697 = vsel %vm338, %v516, 0
    %v700 = vsel %vm338, %v517, 0
    %v703 = vsel %vm338, %v518, 0
    %v706 = vsel %vm338, %v519, 0
    %v709 = vsel %vm338, %v520, 0
    %v712 = vsel %vm338, %v521, 0
    %v715 = vsel %vm338, %v522, 0
    %v718 = vsel %vm338, %v523, 0
    %v721 = vsel %vm338, %v524, 0
    %v724 = vsel %vm338, %v525, 0
    %v727 = vsel %vm338, %v526, 0
    %v730 = vsel %vm338, %v527, 0
    %v733 = vsel %vm338, %v528, 0
    %v736 = vsel %vm338, %v529, 0
    %v739 = vsel %vm338, %v530, 0
    %v742 = vsel %vm338, %v531, 0
    %v745 = vsel %vm338, %v532, 0
    %v748 = vsel %vm338, %v533, 0
    %v751 = vsel %vm338, %v534, 0
    %v754 = vsel %vm338, %v535, 0
    %v757 = vsel %vm338, %v536, 0
    %v760 = vsel %vm338, %v537, 0
    %v763 = vsel %vm338, %v538, 0
    %v766 = vsel %vm338, %v539, 0
    %v769 = vsel %vm338, %v540, 0
    %v772 = vsel %vm338, %v541, 0
    %v775 = vsel %vm338, %v542, 0
    %v778 = vsel %vm338, %v543, 0
    %v781 = vsel %vm338, %v544, 0
    %v784 = vsel %vm338, %v545, 0
    %v787 = vsel %vm338, %v546, 0
    %v790 = vsel %vm338, %v547, 0
    %v793 = vsel %vm338, %v548, 0
    %v796 = vsel %vm338, %v549, 0
    %v799 = vsel %vm338, %v550, 0
    %v802 = vsel %vm338, %v551, 0
    %v805 = vsel %vm338, %v552, 0
    %v808 = vsel %vm338, %v553, 0
    %v811 = vsel %vm338, %v554, 0
    %v814 = vsel %vm338, %v555, 0
    %v817 = vsel %vm338, %v556, 0
    %v820 = vsel %vm338, %v557, 0
    %v823 = vsel %vm338, %v558, 0
    %v826 = vsel %vm338, %v559, 0
    %v829 = vsel %vm338, %v560, 0
    %v832 = vsel %vm338, %v561, 0
    %v835 = vsel %vm338, %v562, 0
    %v838 = vsel %vm338, %v563, 0
    %v841 = vsel %vm338, %v564, 0
    %v844 = vsel %vm338, %v565, 0
    %v847 = vsel %vm338, %v566, 0
    %v850 = vsel %vm338, %v567, 0
    %v853 = vsel %vm338, %v568, 0
    %v856 = vsel %vm338, %v569, 0
    %v859 = vsel %vm338, %v570, 0
    %v862 = vsel %vm338, %v571, 0
    %v865 = vsel %vm338, %v572, 0
    %v868 = vsel %vm338, %v573, 0
    %v871 = vsel %vm338, %v574, 0
    %v874 = vsel %vm338, %v575, 0
    %v877 = vsel %vm338, %v576, 0
    %v880 = vsel %vm338, %v577, 0
    %v883 = vsel %vm338, %v578, 0
    %v886 = vsel %vm338, %v579, 0
    %v889 = vsel %vm338, %v580, 0
    %v892 = vsel %vm338, %v581, 0
    %v895 = vsel %vm338, %v582, 0
    %v898 = vsel %vm338, %v583, 0
    %v901 = vsel %vm338, %v584, 0
    %v904 = vsel %vm338, %v585, 0
    %v907 = vsel %vm338, %v586, 0
    %v910 = vsel %vm338, %v587, 0
    %v913 = vsel %vm338, %v588, 0
    %v916 = vsel %vm338, %v589, 0
    %v919 = vsel %vm338, %v590, 0
    %v922 = vsel %vm338, %v591, 0
    %v925 = vsel %vm338, %v592, 0
    %v928 = vsel %vm338, %v593, 0
    %v931 = vsel %vm338, %v594, 0
    %v934 = vsel %vm338, %v595, 0
    %v937 = vsel %vm338, %v596, 0
    %v940 = vsel %vm338, %v597, 0
    %v943 = vsel %vm338, %v598, 0
    %v946 = vsel %vm338, %v599, 0
    %v949 = vsel %vm338, %v600, 0
    %v952 = vsel %vm338, %v601, 0
    %v955 = vsel %vm338, %v602, 0
    %v958 = vsel %vm338, %v603, 0
    %v961 = vsel %vm338, %v604, 0
    %v964 = vsel %vm338, %v605, 0
    %v967 = vsel %vm338, %v606, 0
    %v970 = vsel %vm338, %v607, 0
    %v973 = vsel %vm338, %v608, 0
    %v976 = vsel %vm338, %v609, 0
    %v979 = vsel %vm338, %v610, 0
    %v982 = vsel %vm338, %v611, 0
    %v985 = vsel %vm338, %v612, 0
    %v988 = vsel %vm338, %v613, 0
    %v991 = vsel %vm338, %v614, 0
    %v994 = vsel %vm338, %v615, 0
    %v997 = vsel %vm338, %v616, 0
    %v1000 = vsel %vm338, %v617, 0
    %1002 = vmatpush.xpose.msra.mxu0 %v664
    %1003 = vmatpush.xpose.msra.mxu0 %v661
    %1004 = vmatpush.xpose.msra.mxu0 %v658
    %1005 = vmatpush.xpose.msra.mxu0 %v655
    %1006 = vmatpush.xpose.msra.mxu0 %v652
    %1007 = vmatpush.xpose.msra.mxu0 %v649
    %1008 = vmatpush.xpose.msra.mxu0 %v646
    %1009 = vmatpush.xpose.msra.mxu0 %v643
    %1010 = vmatpush.xpose.msra.mxu0 %v640
    %1011 = vmatpush.xpose.msra.mxu0 %v637
    %1012 = vmatpush.xpose.msra.mxu0 %v634
    %1013 = vmatpush.xpose.msra.mxu0 %v631
    %1014 = vmatpush.xpose.msra.mxu0 %v628
    %1015 = vmatpush.xpose.msra.mxu0 %v625
    %1016 = vmatpush.xpose.msra.mxu0 %v622
    %1017 = vmatpush.xpose.msra.mxu0 %v619
    %1018 = vmatmul.f32.gmra.mxu0 %v444
    %v1019 = vpop.f32.mrf.mxu0
    %v1020 = vadd.f32 0.0, %v1019
    %1021 = vdwg.mxu0
    %1022 = vmatpush.xpose.msra.mxu0 %v712
    %1023 = vmatpush.xpose.msra.mxu0 %v709
    %1024 = vmatpush.xpose.msra.mxu0 %v706
    %1025 = vmatpush.xpose.msra.mxu0 %v703
    %1026 = vmatpush.xpose.msra.mxu0 %v700
    %1027 = vmatpush.xpose.msra.mxu0 %v697
    %1028 = vmatpush.xpose.msra.mxu0 %v694
    %1029 = vmatpush.xpose.msra.mxu0 %v691
    %1030 = vmatpush.xpose.msra.mxu0 %v688
    %1031 = vmatpush.xpose.msra.mxu0 %v685
    %1032 = vmatpush.xpose.msra.mxu0 %v682
    %1033 = vmatpush.xpose.msra.mxu0 %v679
    %1034 = vmatpush.xpose.msra.mxu0 %v676
    %1035 = vmatpush.xpose.msra.mxu0 %v673
    %1036 = vmatpush.xpose.msra.mxu0 %v670
    %1037 = vmatpush.xpose.msra.mxu0 %v667
    %1038 = vmatmul.f32.gmra.mxu0 %v444
    %v1039 = vpop.f32.mrf.mxu0
    %v1040 = vadd.f32 0.0, %v1039
    %1041 = vdwg.mxu0
    %1042 = vmatpush.xpose.msra.mxu0 %v760
    %1043 = vmatpush.xpose.msra.mxu0 %v757
    %1044 = vmatpush.xpose.msra.mxu0 %v754
    %1045 = vmatpush.xpose.msra.mxu0 %v751
    %1046 = vmatpush.xpose.msra.mxu0 %v748
    %1047 = vmatpush.xpose.msra.mxu0 %v745
    %1048 = vmatpush.xpose.msra.mxu0 %v742
    %1049 = vmatpush.xpose.msra.mxu0 %v739
    %1050 = vmatpush.xpose.msra.mxu0 %v736
    %1051 = vmatpush.xpose.msra.mxu0 %v733
    %1052 = vmatpush.xpose.msra.mxu0 %v730
    %1053 = vmatpush.xpose.msra.mxu0 %v727
    %1054 = vmatpush.xpose.msra.mxu0 %v724
    %1055 = vmatpush.xpose.msra.mxu0 %v721
    %1056 = vmatpush.xpose.msra.mxu0 %v718
    %1057 = vmatpush.xpose.msra.mxu0 %v715
    %1058 = vmatmul.f32.gmra.mxu0 %v444
    %v1059 = vpop.f32.mrf.mxu0
    %v1060 = vadd.f32 0.0, %v1059
    %1061 = vdwg.mxu0
    %1062 = vmatpush.xpose.msra.mxu0 %v808
    %1063 = vmatpush.xpose.msra.mxu0 %v805
    %1064 = vmatpush.xpose.msra.mxu0 %v802
    %1065 = vmatpush.xpose.msra.mxu0 %v799
    %1066 = vmatpush.xpose.msra.mxu0 %v796
    %1067 = vmatpush.xpose.msra.mxu0 %v793
    %1068 = vmatpush.xpose.msra.mxu0 %v790
    %1069 = vmatpush.xpose.msra.mxu0 %v787
    %1070 = vmatpush.xpose.msra.mxu0 %v784
    %1071 = vmatpush.xpose.msra.mxu0 %v781
    %1072 = vmatpush.xpose.msra.mxu0 %v778
    %1073 = vmatpush.xpose.msra.mxu0 %v775
    %1074 = vmatpush.xpose.msra.mxu0 %v772
    %1075 = vmatpush.xpose.msra.mxu0 %v769
    %1076 = vmatpush.xpose.msra.mxu0 %v766
    %1077 = vmatpush.xpose.msra.mxu0 %v763
    %1078 = vmatmul.f32.gmra.mxu0 %v444
    %v1079 = vpop.f32.mrf.mxu0
    %v1080 = vadd.f32 0.0, %v1079
    %1081 = vdwg.mxu0
    %1082 = vmatpush.xpose.msra.mxu0 %v856
    %1083 = vmatpush.xpose.msra.mxu0 %v853
    %1084 = vmatpush.xpose.msra.mxu0 %v850
    %1085 = vmatpush.xpose.msra.mxu0 %v847
    %1086 = vmatpush.xpose.msra.mxu0 %v844
    %1087 = vmatpush.xpose.msra.mxu0 %v841
    %1088 = vmatpush.xpose.msra.mxu0 %v838
    %1089 = vmatpush.xpose.msra.mxu0 %v835
    %1090 = vmatpush.xpose.msra.mxu0 %v832
    %1091 = vmatpush.xpose.msra.mxu0 %v829
    %1092 = vmatpush.xpose.msra.mxu0 %v826
    %1093 = vmatpush.xpose.msra.mxu0 %v823
    %1094 = vmatpush.xpose.msra.mxu0 %v820
    %1095 = vmatpush.xpose.msra.mxu0 %v817
    %1096 = vmatpush.xpose.msra.mxu0 %v814
    %1097 = vmatpush.xpose.msra.mxu0 %v811
    %1098 = vmatmul.f32.gmra.mxu0 %v444
    %v1099 = vpop.f32.mrf.mxu0
    %v1100 = vadd.f32 0.0, %v1099
    %1101 = vdwg.mxu0
    %1102 = vmatpush.xpose.msra.mxu0 %v904
    %1103 = vmatpush.xpose.msra.mxu0 %v901
    %1104 = vmatpush.xpose.msra.mxu0 %v898
    %1105 = vmatpush.xpose.msra.mxu0 %v895
    %1106 = vmatpush.xpose.msra.mxu0 %v892
    %1107 = vmatpush.xpose.msra.mxu0 %v889
    %1108 = vmatpush.xpose.msra.mxu0 %v886
    %1109 = vmatpush.xpose.msra.mxu0 %v883
    %1110 = vmatpush.xpose.msra.mxu0 %v880
    %1111 = vmatpush.xpose.msra.mxu0 %v877
    %1112 = vmatpush.xpose.msra.mxu0 %v874
    %1113 = vmatpush.xpose.msra.mxu0 %v871
    %1114 = vmatpush.xpose.msra.mxu0 %v868
    %1115 = vmatpush.xpose.msra.mxu0 %v865
    %1116 = vmatpush.xpose.msra.mxu0 %v862
    %1117 = vmatpush.xpose.msra.mxu0 %v859
    %1118 = vmatmul.f32.gmra.mxu0 %v444
    %v1119 = vpop.f32.mrf.mxu0
    %v1120 = vadd.f32 0.0, %v1119
    %1121 = vdwg.mxu0
    %1122 = vmatpush.xpose.msra.mxu0 %v952
    %1123 = vmatpush.xpose.msra.mxu0 %v949
    %1124 = vmatpush.xpose.msra.mxu0 %v946
    %1125 = vmatpush.xpose.msra.mxu0 %v943
    %1126 = vmatpush.xpose.msra.mxu0 %v940
    %1127 = vmatpush.xpose.msra.mxu0 %v937
    %1128 = vmatpush.xpose.msra.mxu0 %v934
    %1129 = vmatpush.xpose.msra.mxu0 %v931
    %1130 = vmatpush.xpose.msra.mxu0 %v928
    %1131 = vmatpush.xpose.msra.mxu0 %v925
    %1132 = vmatpush.xpose.msra.mxu0 %v922
    %1133 = vmatpush.xpose.msra.mxu0 %v919
    %1134 = vmatpush.xpose.msra.mxu0 %v916
    %1135 = vmatpush.xpose.msra.mxu0 %v913
    %1136 = vmatpush.xpose.msra.mxu0 %v910
    %1137 = vmatpush.xpose.msra.mxu0 %v907
    %1138 = vmatmul.f32.gmra.mxu0 %v444
    %v1139 = vpop.f32.mrf.mxu0
    %v1140 = vadd.f32 0.0, %v1139
    %1141 = vdwg.mxu0
    %1142 = vmatpush.xpose.msra.mxu0 %v1000
    %1143 = vmatpush.xpose.msra.mxu0 %v997
    %1144 = vmatpush.xpose.msra.mxu0 %v994
    %1145 = vmatpush.xpose.msra.mxu0 %v991
    %1146 = vmatpush.xpose.msra.mxu0 %v988
    %1147 = vmatpush.xpose.msra.mxu0 %v985
    %1148 = vmatpush.xpose.msra.mxu0 %v982
    %1149 = vmatpush.xpose.msra.mxu0 %v979
    %1150 = vmatpush.xpose.msra.mxu0 %v976
    %1151 = vmatpush.xpose.msra.mxu0 %v973
    %1152 = vmatpush.xpose.msra.mxu0 %v970
    %1153 = vmatpush.xpose.msra.mxu0 %v967
    %1154 = vmatpush.xpose.msra.mxu0 %v964
    %1155 = vmatpush.xpose.msra.mxu0 %v961
    %1156 = vmatpush.xpose.msra.mxu0 %v958
    %1157 = vmatpush.xpose.msra.mxu0 %v955
    %1158 = vmatmul.f32.gmra.mxu0 %v444
    %v1159 = vpop.f32.mrf.mxu0
    %v1160 = vadd.f32 0.0, %v1159
    %1161 = vdwg.mxu0
    %v1170 = vrot.slane %v1040, 6
    %v1171 = vrot.slane %v1060, 4
    %v1172 = vrot.slane %v1080, 2
    %v1173 = vrot.slane %v1120, 6
    %v1174 = vrot.slane %v1140, 4
    %v1175 = vrot.slane %v1160, 2
    %vm1176 = vcmask 1041408
    %v1177 = vsel %vm1176, %v1020, %v1170
    %vm1178 = vcmask 1045508
    %v1179 = vsel %vm1178, %v1171, %v1172
    %vm1180 = vcmask 1043456
    %v1181 = vsel %vm1180, %v1177, %v1179
    %v1182 = vsel %vm1176, %v1100, %v1173
    %v1183 = vsel %vm1178, %v1174, %v1175
    %v1184 = vsel %vm1180, %v1182, %v1183
    %1185 = vrot.lane.b32.xlu0 %v1181, 2
    %v1186 = vpop.permute.xlu0 %1185
    %1187 = vrot.lane.b32.xlu0 %v1184, 2
    %v1188 = vpop.permute.xlu0 %1187
    %v1189 = vrot.slane %v1186, 6
    %v1190 = vrot.slane %v1188, 6
    %vm1191 = vcmask 15360
    %v1192 = vsel %vm1191, %v1189, %v1186
    %v1193 = vsel %vm1176, %v1189, %v1190
    %v1194 = vsel %vm1191, %v1193, %v1188
    %vm1198 = vcmask 1041424
    %vm1199 = vcmask 1043458
    %vm1200 = vmor %vm1199, %vm1198
    %vm1201 = vmor %vm1178, %vm1200
    %vm1202 = vcmask 1047558
    %vm1203 = vmor %vm1202, %vm1201
    %1204 = vst.msk [vmem:[#allocation7] sm:$0xff] %vm1203, %v1192
    %1205 = vst [vmem:[#allocation7 + $0x8] sm:$0xff] %v1194
    %vm1206 = vcmask 9216
    %1207 = vst.msk [vmem:[#allocation7 + $0x10] sm:$0x3] %vm1206, %v1190
    %s1208 = sld [smem:[#allocation6]]
    %s1209 = scalar_lea.vmem %s8, %s1208
    // Predicated region
    $region41: #{moco_forward.1} parent=1 // pred_check
      _
    $region42: #{moco_forward.1} parent=1 // pred_check_branch
      %1211 = sbr.rel target = $region44
    $region43: #{moco_forward.1} parent=1 // pred_region
      // Predicated region
      $region56: #{moco_forward.1} parent=43 // pred_check
        _
      $region57: #{moco_forward.1} parent=43 // pred_check_branch
        %1227 = sbr.rel (0) target = $region59
      $region58: #{moco_forward.1} parent=43 // pred_region
        %s1229 = ssub.s32 4, 1
        loop: start=0, step=1, limit=1
        $region60: #{moco_forward.1} parent=58 // loop_pre_header
          _
        $region61: #{moco_forward.1} parent=58 // loop_header
          %s1231 = sphi 0, %s1235
          %p1232 = scmp.ge.s32.totalorder %s1231, 1
          %s1236 = sphi [#allocation3], [#allocation3]
          %s1237 = sphi %s1209, %s1209
        $region62: #{moco_forward.1} parent=58 // loop_header_branch
          %1234 = sbr.rel (%p1232) target = $region66
        $region63: #{moco_forward.1} parent=58 // loop_body
          %v1238 = vld [vmem:[%s1236] sm:%s1229]
          %1239 = vst [vmem:[%s1237] sm:%s1229] %v1238
        $region64: #{moco_forward.1} parent=58 // loop_footer
          %s1235 = sadd.s32 1, %s1231
        $region65: #{moco_forward.1} parent=58 // loop_footer_branch
          %1230 = sbr.rel target = $region61
        $region66: #{moco_forward.1} parent=58 // loop_exit
          _
      $region59: #{moco_forward.1} parent=43 // pred_fallthru
        _
    $region44: #{moco_forward.1} parent=1 // pred_fallthru
      _
    // Predicated region
    $region45: #{moco_forward.1} parent=1 // pred_check
      _
    $region46: #{moco_forward.1} parent=1 // pred_check_branch
      %1213 = sbr.rel (0) target = $region48
    $region47: #{moco_forward.1} parent=1 // pred_region
      %s1215 = ssub.s32 4, 1
      loop: start=0, step=1, limit=1
      $region49: #{moco_forward.1} parent=47 // loop_pre_header
        _
      $region50: #{moco_forward.1} parent=47 // loop_header
        %s1217 = sphi 0, %s1221
        %p1218 = scmp.ge.s32.totalorder %s1217, 1
        %s1222 = sphi [#allocation3], [#allocation3]
        %s1223 = sphi %s1209, %s1209
      $region51: #{moco_forward.1} parent=47 // loop_header_branch
        %1220 = sbr.rel (%p1218) target = $region55
      $region52: #{moco_forward.1} parent=47 // loop_body
        %v1224 = vld [vmem:[%s1222] sm:%s1215]
        %1225 = vst [vmem:[%s1223] sm:%s1215] %v1224
      $region53: #{moco_forward.1} parent=47 // loop_footer
        %s1221 = sadd.s32 1, %s1217
      $region54: #{moco_forward.1} parent=47 // loop_footer_branch
        %1216 = sbr.rel target = $region50
      $region55: #{moco_forward.1} parent=47 // loop_exit
        _
    $region48: #{moco_forward.1} parent=1 // pred_fallthru
      _
    // Predicated region
    $region67: #{moco_forward.1} parent=1 // pred_check
      _
    $region68: #{moco_forward.1} parent=1 // pred_check_branch
      %1242 = sbr.rel (0) target = $region70
    $region69: #{moco_forward.1} parent=1 // pred_region
      %1243 = vsyncadd [#allocation5], 32
    $region70: #{moco_forward.1} parent=1 // pred_fallthru
      _
    %s1244 = smul.u32 2, 1
    %s1245 = sshll.u32 %s1244, 4
    %1246 = dma.done [#allocation5], %s1245
    // Predicated region
    $region71: #{moco_forward.1} parent=1 // pred_check
      _
    $region72: #{moco_forward.1} parent=1 // pred_check_branch
      %1248 = sbr.rel (0) target = $region74
    $region73: #{moco_forward.1} parent=1 // pred_region
      %1250 = vsyncadd [#allocation8], 0
      %s1252 = sshll.u32 [#allocation7], 4
      %s1253 = int_to_ptr.vmem [resolvable:$true] %s1252
      %s1254 = sshll.u32 %s6, 4
      %s1255 = int_to_ptr.hbm [resolvable:$true] %s1254
      %1257 = dma.vmem_to_hbm [thread:$0]  %s1253, 288, %s1255, [#allocation8]
    $region74: #{moco_forward.1} parent=1 // pred_fallthru
      _
    // Predicated region
    $region75: #{moco_forward.1} parent=1 // pred_check
      _
    $region76: #{moco_forward.1} parent=1 // pred_check_branch
      %1259 = sbr.rel (0) target = $region78
    $region77: #{moco_forward.1} parent=1 // pred_region
      _
    $region78: #{moco_forward.1} parent=1 // pred_fallthru
      _
    // Predicated region
    $region79: #{moco_forward.1} parent=1 // pred_check
      _
    $region80: #{moco_forward.1} parent=1 // pred_check_branch
      %1261 = sbr.rel (0) target = $region82
    $region81: #{moco_forward.1} parent=1 // pred_region
      %1263 = dma.done [#allocation8], 288
    $region82: #{moco_forward.1} parent=1 // pred_fallthru
      _
    // Predicated region
    $region83: #{moco_forward.1} parent=1 // pred_check
      _
    $region84: #{moco_forward.1} parent=1 // pred_check_branch
      %1265 = sbr.rel (0) target = $region86
    $region85: #{moco_forward.1} parent=1 // pred_region
      _
    $region86: #{moco_forward.1} parent=1 // pred_fallthru
      _
    %1266 = vsyncpa [#allocation8], 1
  %1267 = vsyncmov [#allocation4]
  %s1268 = vpop.sfrf %1267
  %p1269 = scmp.eq.s32.totalorder %s1268, 0
  %p1270 = pneg %p1269
  %1272 = shalt.err (%p1270)
  %1273 = vsyncmov [#allocation5]
  %s1274 = vpop.sfrf %1273
  %p1275 = scmp.eq.s32.totalorder %s1274, 0
  %p1276 = pneg %p1275
  %1278 = shalt.err (%p1276)

</llo_original>
